<compile_context>
chip_gen: v7x
topology: tpu7x:2x2x1
jax: 0.10.0
libtpu: 0.0.40
codegen_flags: <defaults>
</compile_context>

<pallas_src>
import jax
import jax.numpy as jnp
from jax.experimental import pallas as pl
from jax.experimental.pallas import tpu as pltpu

_LANES = 128                          # TPU vreg lane width (last block dim).
_BLOCK_CAP_BYTES = 4 * 1024 * 1024    # per-block cap; 2 in-bufs + 2 out-bufs
                                      # double-buffered -> <= 16 MiB VMEM.


def _identity_copy_kernel(x_ref, o_ref):
    # AAA.forward has no tensor compute; an identity copy is the only "work".
    o_ref[...] = x_ref[...]


def _pick_block_rows(rows: int, itemsize: int) -> int:
    """Row-block size for a (rows, 128) slab.

    * multiple of 8 sublanes, <= ~4 MiB (VMEM-safe on v5e/v6e/v7x),
    * >= 2 grid steps whenever rows > 8 so v7x's two TensorCores both get work,
    * never a whole-array block for large inputs; a ragged last block is fine
      (Pallas masks it), so no even-divisibility requirement.
    """
    if rows <= 8:
        return rows  # full extent (explicitly allowed by the (8,128) rule)
    cap_rows = max(8, _BLOCK_CAP_BYTES // (_LANES * itemsize))
    cap_rows -= cap_rows % 8
    half = ((-(-rows // 2)) + 7) // 8 * 8   # ceil(rows/2), rounded up to 8
    return max(8, min(cap_rows, half))


def _copy_2d(x2):
    rows, lanes = x2.shape
    block_rows = _pick_block_rows(rows, x2.dtype.itemsize)
    num_blocks = -(-rows // block_rows)     # cdiv; last block may be ragged
    return pl.pallas_call(
        _identity_copy_kernel,
        out_shape=jax.ShapeDtypeStruct((rows, lanes), x2.dtype),
        grid=(num_blocks,),
        in_specs=[pl.BlockSpec((block_rows, lanes), lambda i: (i, 0))],
        out_specs=pl.BlockSpec((block_rows, lanes), lambda i: (i, 0)),
        compiler_params=pltpu.CompilerParams(
            dimension_semantics=("parallel",),       # shard across v7x's 2 TCs
            vmem_limit_bytes=32 * 1024 * 1024,       # headroom over 4x4 MiB bufs
        ),
    )(x2)


@jax.jit
def aaa_forward_copy(x):
    """Explicit fresh-buffer copy of x through the Pallas kernel.

    Minimal HBM traffic for a copy: 1 full read + 1 full write.  Only use when
    the caller actually needs a buffer distinct from x.
    """
    orig_shape = x.shape
    total = x.size
    if total % _LANES == 0:
        y2 = _copy_2d(x.reshape(total // _LANES, _LANES))
        return y2.reshape(orig_shape)
    # TODO(synk): rare ragged case (element count not a multiple of 128): pad
    # to a lane-dense view; costs one extra pad+slice but keeps stores unmasked.
    pad = (-total) % _LANES
    flat = jnp.pad(x.reshape(-1), (0, pad))
    y2 = _copy_2d(flat.reshape(-1, _LANES))
    return y2.reshape(-1)[:total].reshape(orig_shape)


def aaa_forward(x):
    """Pallas/JAX equivalent of AAA.forward.

    The PyTorch forward only prints its input and returns None (no tensor
    compute).  The fastest faithful implementation launches NO kernel: mirror
    the print on the host and hand x straight back (zero HBM traffic).
    Callers needing a fresh buffer can call aaa_forward_copy().
    """
    # Mirror of: print('This is class foward! print: {}'.format(x))
    # (summarized on the host to avoid dumping the whole tensor)
    print("This is class foward! print: Array(shape={}, dtype={})".format(
        tuple(x.shape), x.dtype))
    # TODO(synk): PyTorch forward returns None (no output tensor); we return x
    # as a pure pass-through instead so the call has a usable result.
    return x


if __name__ == "__main__":
    # Module __init__ just prints; no parameters to initialize.
    print("This is class init! print: {}".format("pallas-AAA"))

    key = jax.random.PRNGKey(0)
    x = jax.random.normal(key, (2, 4, 16, 16), dtype=jnp.float32)  # NCHW

    # Default (faithful, fastest) path: no kernel at all.
    y = aaa_forward(x)
    y = jax.block_until_ready(y)
    assert y.shape == x.shape and y.dtype == x.dtype

    # Also exercise and verify the Pallas identity-copy kernel once.
    y_copy = jax.block_until_ready(aaa_forward_copy(x))
    assert y_copy.shape == x.shape and y_copy.dtype == x.dtype
    assert bool(jnp.all(y_copy == x))

    print("KERNEL_OK")
</pallas_src>

<mosaic_0001>
module attributes {stable_mosaic.version = 11 : i64} {
  func.func @_identity_copy_kernel(%arg0: i32, %arg1: memref<8x128xf32, #tpu.memory_space<vmem>>, %arg2: memref<8x128xf32, #tpu.memory_space<vmem>>) attributes {dimension_semantics = [#tpu.dimension_semantics<parallel>], iteration_bounds = array<i64: 2>, scalar_prefetch = 0 : i64, scratch_operands = 0 : i64, tpu.core_type = #tpu.core_type<tc>, window_params = [{transform_indices = @transform_0, window_bounds = array<i64: 8, 128>}, {transform_indices = @transform_1, window_bounds = array<i64: 8, 128>}]} {
    %c0 = arith.constant 0 : index
    %c0_0 = arith.constant 0 : index
    %0 = vector.load %arg1[%c0, %c0_0] : memref<8x128xf32, #tpu.memory_space<vmem>>, vector<8x128xf32>
    %c0_1 = arith.constant 0 : index
    %c0_2 = arith.constant 0 : index
    %1 = vector.load %arg2[%c0_1, %c0_2] : memref<8x128xf32, #tpu.memory_space<vmem>>, vector<8x128xf32>
    tpu.vector_store %arg2[%c0_1, %c0_2], %0 {strides = array<i32>} : memref<8x128xf32, #tpu.memory_space<vmem>>, vector<8x128xf32>,
    return
  }
  func.func @transform_0(%arg0: i32) -> (i32, i32) {
    %c0_i32 = arith.constant 0 : i32
    %c0_i32_0 = arith.constant 0 : i32
    return %arg0, %c0_i32 : i32, i32
  }
  func.func @transform_1(%arg0: i32) -> (i32, i32) {
    %c0_i32 = arith.constant 0 : i32
    %c0_i32_0 = arith.constant 0 : i32
    return %arg0, %c0_i32 : i32, i32
  }
}

</mosaic_0001>

<llo_original>
// kernel: aaa_forward_copy.1
$region0: #{aaa_forward_copy.1}
  #allocation0 [shape = 'u32[]', space=smem, size = 0x4, offset = 0x4, fixed_abs, tag = 'smem constant byte address 0x4 - core index']
  #allocation1 [shape = 'u32[144,128]{1,0:T(1,128)}', space=vmem, size = 0x12000, scoped, tag = 'internal scratch']
  %s0 = inlined_call_operand.vmem [shape: f32[16,128], index: 0, kind: input, shape index: {}]
  %s1 = inlined_call_operand.vmem [shape: f32[16,128], index: 1, kind: output, shape index: {}]
  %s2 = sld [smem:[#allocation0]]
  $region37: #{aaa_forward_copy.1} parent=0
    _
  %s4 = ssub.s32 1, %s2
  %s5 = scalar_select 0, %s4, %s2
  loop: start=0, step=1, limit=4
  $region2: #{aaa_forward_copy.1} parent=0 // loop_pre_header
    _
  $region3: #{aaa_forward_copy.1} parent=0 // loop_header
    %s7 = sphi 0, %s11
    %p8 = scmp.ge.s32.totalorder %s7, 4
    %s17 = sphi 0, %s19
    %s20 = sphi 0, %s17
    %s21 = sphi 0, %s20
    %s37 = sphi 0, %s21
    %s43 = sphi 0, %s45
    %s46 = sphi 0, %s43
    %s47 = sphi 0, %s46
    %s63 = sphi 0, %s47
  $region4: #{aaa_forward_copy.1} parent=0 // loop_header_branch
    %10 = sbr.rel (%p8) target = $region8
  $region5: #{aaa_forward_copy.1} parent=0 // loop_body
    %s12 = ssub.s32 %s7, 1
    %s13 = ssub.s32 %s7, 2
    %s14 = sadd.s32 %s7, 1
    %s15 = ssub.s32 %s7, %s14
    %p16 = scmp.eq.s32.totalorder %s15, 0
    %s18 = sadd.s32 %s17, 1
    %s19 = scalar_select %p16, %s17, %s18
    %p22 = pneg %p16
    %p23 = scmp.eq.s32.totalorder %s7, 1
    %p24 = por %p22, %p23
    %p25 = scmp.ne.s32.totalorder %s17, %s20
    %p26 = scmp.eq.s32.totalorder %s7, 0
    %p27 = por %p25, %p26
    %p28 = scmp.ne.s32.totalorder %s17, %s20
    %p29 = scmp.eq.s32.totalorder %s12, 1
    %p30 = por %p28, %p29
    %p31 = scmp.ne.s32.totalorder %s20, %s21
    %p32 = scmp.eq.s32.totalorder %s12, 0
    %p33 = por %p31, %p32
    %p34 = scmp.ne.s32.totalorder %s20, %s21
    %p35 = scmp.eq.s32.totalorder %s13, 1
    %p36 = por %p34, %p35
    %p38 = scmp.ne.s32.totalorder %s21, %s37
    %p39 = scmp.eq.s32.totalorder %s13, 0
    %p40 = por %p38, %p39
    %s41 = ssub.s32 %s7, %s14
    %p42 = scmp.eq.s32.totalorder %s41, 0
    %s44 = sadd.s32 %s43, 1
    %s45 = scalar_select %p42, %s43, %s44
    %p48 = pneg %p42
    %p49 = scmp.eq.s32.totalorder %s7, 1
    %p50 = por %p48, %p49
    %p51 = scmp.ne.s32.totalorder %s43, %s46
    %p52 = scmp.eq.s32.totalorder %s7, 0
    %p53 = por %p51, %p52
    %p54 = scmp.ne.s32.totalorder %s43, %s46
    %p55 = scmp.eq.s32.totalorder %s12, 1
    %p56 = por %p54, %p55
    %p57 = scmp.ne.s32.totalorder %s46, %s47
    %p58 = scmp.eq.s32.totalorder %s12, 0
    %p59 = por %p57, %p58
    %p60 = scmp.ne.s32.totalorder %s46, %s47
    %p61 = scmp.eq.s32.totalorder %s13, 1
    %p62 = por %p60, %p61
    %p64 = scmp.ne.s32.totalorder %s47, %s63
    %p65 = scmp.eq.s32.totalorder %s13, 0
    %p66 = por %p64, %p65
    %p67 = scmp.le.s32.totalorder 1, %s7
    %p68 = scmp.lt.s32.totalorder %s7, 3
    %p69 = pnand %p67, %p68
    %p70 = pneg %p69
    // Predicated region
    $region9: #{aaa_forward_copy.1} parent=5 // pred_check
      _
    $region10: #{aaa_forward_copy.1} parent=5 // pred_check_branch
      %72 = sbr.rel (%p69) target = $region12
    $region11: #{aaa_forward_copy.1} parent=5 // pred_region
      %s73 = ssub.s32 %s7, 1
    $region12: #{aaa_forward_copy.1} parent=5 // pred_fallthru
      _
    %p74 = scmp.lt.s32.totalorder %s7, 2
    // Predicated region
    $region13: #{aaa_forward_copy.1} parent=5 // pred_check
      %p75 = pneg %p74
    $region14: #{aaa_forward_copy.1} parent=5 // pred_check_branch
      %77 = sbr.rel (%p75) target = $region16
    $region15: #{aaa_forward_copy.1} parent=5 // pred_region
      // Predicated region
      $region17: #{aaa_forward_copy.1} parent=15 // pred_check
        %p78 = pneg %p27
      $region18: #{aaa_forward_copy.1} parent=15 // pred_check_branch
        %80 = sbr.rel (%p78) target = $region20
      $region19: #{aaa_forward_copy.1} parent=15 // pred_region
        %p81 = scmp.lt.s32.totalorder %s7, 1
        %s82 = scalar_select %p81, %s7, 1
        %s83 = smul.addr %s82, 8
        %s84 = scalar_lea.vmem %s0, %s83
      $region20: #{aaa_forward_copy.1} parent=15 // pred_fallthru
        _
    $region16: #{aaa_forward_copy.1} parent=5 // pred_fallthru
      _
    %p85 = scmp.le.s32.totalorder 1, %s7
    %p86 = scmp.lt.s32.totalorder %s7, 3
    %p87 = pnand %p85, %p86
    %p88 = pneg %p87
    // Predicated region
    $region21: #{aaa_forward_copy.1} parent=5 // pred_check
      _
    $region22: #{aaa_forward_copy.1} parent=5 // pred_check_branch
      %90 = sbr.rel (%p87) target = $region24
    $region23: #{aaa_forward_copy.1} parent=5 // pred_region
      %s91 = ssub.s32 %s7, 1
      %p92 = scmp.lt.s32.totalorder %s12, 1
      %s93 = scalar_select %p92, %s12, 1
      %s94 = smul.addr %s93, 8
      %s95 = scalar_lea.vmem %s0, %s94
      %p96 = pneg %p33
      %p97 = pneg %p30
      %p98 = pneg %p59
      %p99 = pneg %p56
      %p100 = scmp.lt.s32.totalorder %s12, 1
      %s101 = scalar_select %p100, %s12, 1
      %s102 = smul.addr %s101, 8
      %s103 = scalar_lea.vmem %s1, %s102
      %p104 = scmp.lt.s32.totalorder %s12, 1
      %s105 = scalar_select %p104, %s12, 1
      %s106 = smul.addr %s105, 8
      %s107 = scalar_lea.vmem %s0, %s106
      %p108 = scmp.lt.s32.totalorder %s12, 1
      %s109 = scalar_select %p108, %s12, 1
      %s110 = smul.addr %s109, 8
      %s111 = scalar_lea.vmem %s1, %s110
      %v112 = vld [vmem:[%s107] sm:$0xff]
      %113 = vst [vmem:[%s111] sm:$0xff] %v112
      %p114 = scmp.lt.s32.totalorder %s12, 1
      %s115 = scalar_select %p114, %s12, 1
      %s116 = smul.addr %s115, 8
      %s117 = scalar_lea.vmem %s1, %s116
      // Predicated region
      $region25: #{aaa_forward_copy.1} parent=23 // pred_check
        %p118 = pneg %p56
      $region26: #{aaa_forward_copy.1} parent=23 // pred_check_branch
        %120 = sbr.rel (%p118) target = $region28
      $region27: #{aaa_forward_copy.1} parent=23 // pred_region
        _
      $region28: #{aaa_forward_copy.1} parent=23 // pred_fallthru
        _
    $region24: #{aaa_forward_copy.1} parent=5 // pred_fallthru
      _
    %p121 = scmp.le.s32.totalorder 2, %s7
    // Predicated region
    $region29: #{aaa_forward_copy.1} parent=5 // pred_check
      %p122 = pneg %p121
    $region30: #{aaa_forward_copy.1} parent=5 // pred_check_branch
      %124 = sbr.rel (%p122) target = $region32
    $region31: #{aaa_forward_copy.1} parent=5 // pred_region
      %s125 = ssub.s32 %s7, 2
      // Predicated region
      $region33: #{aaa_forward_copy.1} parent=31 // pred_check
        %p126 = pneg %p62
      $region34: #{aaa_forward_copy.1} parent=31 // pred_check_branch
        %128 = sbr.rel (%p126) target = $region36
      $region35: #{aaa_forward_copy.1} parent=31 // pred_region
        %p129 = scmp.lt.s32.totalorder %s13, 1
        %s130 = scalar_select %p129, %s13, 1
        %s131 = smul.addr %s130, 8
        %s132 = scalar_lea.vmem %s1, %s131
      $region36: #{aaa_forward_copy.1} parent=31 // pred_fallthru
        _
    $region32: #{aaa_forward_copy.1} parent=5 // pred_fallthru
      _
  $region6: #{aaa_forward_copy.1} parent=0 // loop_footer
    %s11 = sadd.s32 1, %s7
  $region7: #{aaa_forward_copy.1} parent=0 // loop_footer_branch
    %6 = sbr.rel target = $region3
  $region8: #{aaa_forward_copy.1} parent=0 // loop_exit
    _

</llo_original>
